<compile_context>
chip_gen: v7x
topology: tpu7x:2x2x1
jax: 0.10.0
libtpu: 0.0.40
codegen_flags: <defaults>
</compile_context>

<pallas_src>
import math

import jax
import jax.numpy as jnp
from jax.experimental import pallas as pl
from jax.experimental.pallas import tpu as pltpu


def _build_pe(d_model: int, max_len: int) -> jnp.ndarray:
    """Reproduce the PyTorch buffer construction exactly (host-side glue).

    pe[:, 0::2] = sin(pos / denom), pe[:, 1::2] = cos(pos / denom)
    with denom = exp(arange(0, d_model, 2) * ln(10000) / d_model).
    Returned shape: (max_len, 1, d_model)  (after unsqueeze(0).transpose(0,1)).
    """
    position = jnp.arange(0, max_len, dtype=jnp.float32)[:, None]          # (L, 1)
    denominator = jnp.exp(
        jnp.arange(0, d_model, 2, dtype=jnp.float32) * (math.log(10000.0) / d_model)
    )                                                                       # (D/2,)
    angles = position / denominator                                         # (L, D/2)
    pe = jnp.zeros((max_len, d_model), dtype=jnp.float32)
    pe = pe.at[:, 0::2].set(jnp.sin(angles))
    pe = pe.at[:, 1::2].set(jnp.cos(angles))
    return pe[:, None, :]                                                   # (L, 1, D)


def _pe_add_kernel(x_ref, pe_ref, o_ref):
    # x_ref: (tile_t, B, D), pe_ref: (tile_t, 1, D) -> broadcast-add over batch.
    # Explicit cast so a bf16 output never relies on an implicit downcast.
    o_ref[...] = (x_ref[...] + pe_ref[...]).astype(o_ref.dtype)


def _choose_tile_t(T: int, B: int, D: int, itemsize: int,
                   target_block_bytes: int = 4 * 1024 * 1024) -> int:
    """Pick a T-tile so one x block is ~4 MiB of *padded* VMEM.

    The trailing (B, D) tile is padded to (8, 128) multiples in VMEM, so size
    by the padded footprint.  With ~4 MiB blocks, the pipeline's
    2*(x + out + pe) buffers stay comfortably under ~20 MiB on every chip.
    """
    sub = -(-B // 8) * 8
    lane = -(-D // 128) * 128
    row_bytes = sub * lane * itemsize
    return max(1, min(T, target_block_bytes // max(row_bytes, 1)))


def positional_encoding_forward(x: jnp.ndarray, pe: jnp.ndarray,
                                *, tile_t: int | None = None) -> jnp.ndarray:
    """x: (T, B, D); pe: (maxLen, 1, D) float32.  Returns x + pe[:T] (dtype of x)."""
    T, B, D = x.shape
    pe_t = pe[:T].astype(x.dtype)          # (T, 1, D) — static slice/cast is glue.

    if tile_t is None:
        tile_t = _choose_tile_t(T, B, D, jnp.dtype(x.dtype).itemsize)
    tile_t = max(1, min(tile_t, T))
    grid_t = pl.cdiv(T, tile_t)

    return pl.pallas_call(
        _pe_add_kernel,
        out_shape=jax.ShapeDtypeStruct((T, B, D), x.dtype),
        grid_spec=pltpu.PrefetchScalarGridSpec(
            num_scalar_prefetch=0,
            grid=(grid_t,),
            in_specs=[
                # Trailing (B, D) == full array dims -> always a legal block,
                # lane-dense whenever D is a multiple of 128.
                pl.BlockSpec((tile_t, B, D), lambda i: (i, 0, 0)),
                pl.BlockSpec((tile_t, 1, D), lambda i: (i, 0, 0)),
            ],
            out_specs=pl.BlockSpec((tile_t, B, D), lambda i: (i, 0, 0)),
        ),
        # Write the result over x's HBM buffer (no extra output allocation).
        input_output_aliases={0: 0},
        compiler_params=pltpu.CompilerParams(
            # Each T-tile is independent -> megacore sharding on v7x.
            dimension_semantics=("parallel",),
            vmem_limit_bytes=32 * 1024 * 1024,
        ),
    )(x, pe_t)


if __name__ == "__main__":
    d_model = 32
    max_len = 32
    T, B = 16, 2

    pe = _build_pe(d_model, max_len)  # deterministic "parameter" (buffer)

    key = jax.random.PRNGKey(0)
    x = jax.random.normal(key, (T, B, d_model), dtype=jnp.float32)

    # Reference: plain JAX broadcast add (the module's forward).
    ref = x + pe[:T]

    # Multi-tile path (grid = (4,), exercises pipelining) and the auto path.
    out_tiled = positional_encoding_forward(x, pe, tile_t=4)
    out_auto = positional_encoding_forward(x, pe)
    out_tiled, out_auto = jax.block_until_ready((out_tiled, out_auto))

    assert out_tiled.shape == (T, B, d_model)
    assert jnp.allclose(out_tiled, ref, atol=1e-6), "mismatch vs reference (tiled)"
    assert jnp.allclose(out_auto, ref, atol=1e-6), "mismatch vs reference (auto)"

    print("KERNEL_OK")
</pallas_src>

<mosaic_0001>
module attributes {stable_mosaic.version = 11 : i64} {
  func.func @_pe_add_kernel(%arg0: i32, %arg1: memref<4x2x32xf32, #tpu.memory_space<vmem>>, %arg2: memref<4x1x32xf32, #tpu.memory_space<vmem>>, %arg3: memref<4x2x32xf32, #tpu.memory_space<vmem>>) attributes {dimension_semantics = [#tpu.dimension_semantics<parallel>], iteration_bounds = array<i64: 4>, scalar_prefetch = 0 : i64, scratch_operands = 0 : i64, tpu.core_type = #tpu.core_type<tc>, window_params = [{transform_indices = @transform_0, window_bounds = array<i64: 4, 2, 32>}, {transform_indices = @transform_1, window_bounds = array<i64: 4, 1, 32>}, {transform_indices = @transform_2, window_bounds = array<i64: 4, 2, 32>}]} {
    %c0 = arith.constant 0 : index
    %c0_0 = arith.constant 0 : index
    %c0_1 = arith.constant 0 : index
    %0 = vector.load %arg1[%c0, %c0_0, %c0_1] : memref<4x2x32xf32, #tpu.memory_space<vmem>>, vector<4x2x32xf32>
    %c0_2 = arith.constant 0 : index
    %c0_3 = arith.constant 0 : index
    %c0_4 = arith.constant 0 : index
    %1 = vector.load %arg2[%c0_2, %c0_3, %c0_4] : memref<4x1x32xf32, #tpu.memory_space<vmem>>, vector<4x1x32xf32>
    %2 = vector.broadcast %1 : vector<4x1x32xf32> to vector<4x2x32xf32>
    %3 = arith.addf %0, %2 : vector<4x2x32xf32>
    %c0_5 = arith.constant 0 : index
    %c0_6 = arith.constant 0 : index
    %c0_7 = arith.constant 0 : index
    %4 = vector.load %arg3[%c0_5, %c0_6, %c0_7] : memref<4x2x32xf32, #tpu.memory_space<vmem>>, vector<4x2x32xf32>
    tpu.vector_store %arg3[%c0_5, %c0_6, %c0_7], %3 {strides = array<i32>} : memref<4x2x32xf32, #tpu.memory_space<vmem>>, vector<4x2x32xf32>,
    return
  }
  func.func @transform_0(%arg0: i32) -> (i32, i32, i32) {
    %c0_i32 = arith.constant 0 : i32
    %c0_i32_0 = arith.constant 0 : i32
    %c0_i32_1 = arith.constant 0 : i32
    return %arg0, %c0_i32, %c0_i32_0 : i32, i32, i32
  }
  func.func @transform_1(%arg0: i32) -> (i32, i32, i32) {
    %c0_i32 = arith.constant 0 : i32
    %c0_i32_0 = arith.constant 0 : i32
    %c0_i32_1 = arith.constant 0 : i32
    return %arg0, %c0_i32, %c0_i32_0 : i32, i32, i32
  }
  func.func @transform_2(%arg0: i32) -> (i32, i32, i32) {
    %c0_i32 = arith.constant 0 : i32
    %c0_i32_0 = arith.constant 0 : i32
    %c0_i32_1 = arith.constant 0 : i32
    return %arg0, %c0_i32, %c0_i32_0 : i32, i32, i32
  }
}

</mosaic_0001>

<llo_original>
// kernel: tpu_custom_call.1
$region0: #{tpu_custom_call.1}
  #allocation0 [shape = 'u32[]', space=smem, size = 0x4, offset = 0x4, fixed_abs, tag = 'smem constant byte address 0x4 - core index']
  #allocation1 [shape = 'u32[144,128]{1,0:T(1,128)}', space=vmem, size = 0x12000, scoped, tag = 'internal scratch']
  %s0 = inlined_call_operand.hbm [shape: f32[16,2,32], index: 0, kind: input, shape index: {}, may-alias: {0,2}]
  %s1 = inlined_call_operand.vmem [shape: f32[16,1,32], index: 1, kind: input, shape index: {}]
  %s2 = inlined_call_operand.hbm [shape: f32[16,2,32], index: 2, kind: output, shape index: {}, may-alias: {0,2}]
  %s3 = sld [smem:[#allocation0]]
  $region45: #{tpu_custom_call.1} parent=0
    _
  %s5 = ssub.s32 1, %s3
  %s6 = scalar_select 0, %s5, %s3
  $region1: #{tpu_custom_call.1} parent=0
    #allocation2 [shape = 'u8[8192]{0}', space=vmem, size = 0x2000, scoped, tag = 'input window, operand 0']
    #allocation3 [shape = 's32[2]{0}', space=sflag, size = 0x8, scoped, tag = 'scoped memory for tpu_custom_call.1']
    #allocation4 [shape = 's32[2]{0}', space=sflag, size = 0x8, scoped, tag = 'scoped memory for tpu_custom_call.1']
    #allocation5 [shape = 'u8[8192]{0}', space=vmem, size = 0x2000, scoped, tag = 'output window, operand 0']
    %7 = vsyncpa [#allocation3], 0
    %s8 = scalar_lea.sflag [#allocation3], 1
    %9 = vsyncpa %s8, 0
    %10 = vsyncpa [#allocation4], 0
    %s11 = scalar_lea.sflag [#allocation4], 1
    %12 = vsyncpa %s11, 0
    loop: start=0, step=1, limit=6
    $region2: #{tpu_custom_call.1} parent=1 // loop_pre_header
      _
    $region3: #{tpu_custom_call.1} parent=1 // loop_header
      %s14 = sphi 0, %s18
      %p15 = scmp.ge.s32.totalorder %s14, 6
      %s24 = sphi 0, %s26
      %s27 = sphi 0, %s24
      %s28 = sphi 0, %s27
      %s44 = sphi 0, %s28
      %s50 = sphi 0, %s52
      %s53 = sphi 0, %s50
      %s54 = sphi 0, %s53
      %s70 = sphi 0, %s54
      %s76 = sphi 0, %s78
      %s79 = sphi 0, %s76
      %s80 = sphi 0, %s79
      %s96 = sphi 0, %s80
    $region4: #{tpu_custom_call.1} parent=1 // loop_header_branch
      %17 = sbr.rel (%p15) target = $region8
    $region5: #{tpu_custom_call.1} parent=1 // loop_body
      %s19 = ssub.s32 %s14, 1
      %s20 = ssub.s32 %s14, 2
      %s21 = sadd.s32 %s14, 1
      %s22 = ssub.s32 %s14, %s21
      %p23 = scmp.eq.s32.totalorder %s22, 0
      %s25 = sadd.s32 %s24, 1
      %s26 = scalar_select %p23, %s24, %s25
      %p29 = pneg %p23
      %p30 = scmp.eq.s32.totalorder %s14, 3
      %p31 = por %p29, %p30
      %p32 = scmp.ne.s32.totalorder %s24, %s27
      %p33 = scmp.eq.s32.totalorder %s14, 0
      %p34 = por %p32, %p33
      %p35 = scmp.ne.s32.totalorder %s24, %s27
      %p36 = scmp.eq.s32.totalorder %s19, 3
      %p37 = por %p35, %p36
      %p38 = scmp.ne.s32.totalorder %s27, %s28
      %p39 = scmp.eq.s32.totalorder %s19, 0
      %p40 = por %p38, %p39
      %p41 = scmp.ne.s32.totalorder %s27, %s28
      %p42 = scmp.eq.s32.totalorder %s20, 3
      %p43 = por %p41, %p42
      %p45 = scmp.ne.s32.totalorder %s28, %s44
      %p46 = scmp.eq.s32.totalorder %s20, 0
      %p47 = por %p45, %p46
      %s48 = ssub.s32 %s14, %s21
      %p49 = scmp.eq.s32.totalorder %s48, 0
      %s51 = sadd.s32 %s50, 1
      %s52 = scalar_select %p49, %s50, %s51
      %p55 = pneg %p49
      %p56 = scmp.eq.s32.totalorder %s14, 3
      %p57 = por %p55, %p56
      %p58 = scmp.ne.s32.totalorder %s50, %s53
      %p59 = scmp.eq.s32.totalorder %s14, 0
      %p60 = por %p58, %p59
      %p61 = scmp.ne.s32.totalorder %s50, %s53
      %p62 = scmp.eq.s32.totalorder %s19, 3
      %p63 = por %p61, %p62
      %p64 = scmp.ne.s32.totalorder %s53, %s54
      %p65 = scmp.eq.s32.totalorder %s19, 0
      %p66 = por %p64, %p65
      %p67 = scmp.ne.s32.totalorder %s53, %s54
      %p68 = scmp.eq.s32.totalorder %s20, 3
      %p69 = por %p67, %p68
      %p71 = scmp.ne.s32.totalorder %s54, %s70
      %p72 = scmp.eq.s32.totalorder %s20, 0
      %p73 = por %p71, %p72
      %s74 = ssub.s32 %s14, %s21
      %p75 = scmp.eq.s32.totalorder %s74, 0
      %s77 = sadd.s32 %s76, 1
      %s78 = scalar_select %p75, %s76, %s77
      %p81 = pneg %p75
      %p82 = scmp.eq.s32.totalorder %s14, 3
      %p83 = por %p81, %p82
      %p84 = scmp.ne.s32.totalorder %s76, %s79
      %p85 = scmp.eq.s32.totalorder %s14, 0
      %p86 = por %p84, %p85
      %p87 = scmp.ne.s32.totalorder %s76, %s79
      %p88 = scmp.eq.s32.totalorder %s19, 3
      %p89 = por %p87, %p88
      %p90 = scmp.ne.s32.totalorder %s79, %s80
      %p91 = scmp.eq.s32.totalorder %s19, 0
      %p92 = por %p90, %p91
      %p93 = scmp.ne.s32.totalorder %s79, %s80
      %p94 = scmp.eq.s32.totalorder %s20, 3
      %p95 = por %p93, %p94
      %p97 = scmp.ne.s32.totalorder %s80, %s96
      %p98 = scmp.eq.s32.totalorder %s20, 0
      %p99 = por %p97, %p98
      %p100 = scmp.le.s32.totalorder 1, %s14
      %p101 = scmp.lt.s32.totalorder %s14, 5
      %p102 = pnand %p100, %p101
      %p103 = pneg %p102
      // Predicated region
      $region9: #{tpu_custom_call.1} parent=5 // pred_check
        _
      $region10: #{tpu_custom_call.1} parent=5 // pred_check_branch
        %105 = sbr.rel (%p102) target = $region12
      $region11: #{tpu_custom_call.1} parent=5 // pred_region
        %s106 = ssub.s32 %s14, 1
      $region12: #{tpu_custom_call.1} parent=5 // pred_fallthru
        _
      %p107 = scmp.lt.s32.totalorder %s14, 4
      // Predicated region
      $region13: #{tpu_custom_call.1} parent=5 // pred_check
        %p108 = pneg %p107
      $region14: #{tpu_custom_call.1} parent=5 // pred_check_branch
        %110 = sbr.rel (%p108) target = $region16
      $region15: #{tpu_custom_call.1} parent=5 // pred_region
        // Predicated region
        $region17: #{tpu_custom_call.1} parent=15 // pred_check
          %p111 = pneg %p34
        $region18: #{tpu_custom_call.1} parent=15 // pred_check_branch
          %113 = sbr.rel (%p111) target = $region20
        $region19: #{tpu_custom_call.1} parent=15 // pred_region
          %s114 = sand.u32 %s24, 1
          %s115 = scalar_lea.sflag [#allocation3], %s114
          %s116 = sand.u32 %s24, 1
          %s117 = smul.addr %s116, 8
          %s118 = scalar_lea.vmem [#allocation2], %s117
          %s119 = smul.u32 4, %s14
          %s121 = ssub.s32 128, 128
          %122 = vsyncadd %s115, %s121
          %s123 = smul.addr %s119, 32
          %s124 = scalar_lea.hbm %s0, %s123
          %s125 = sshll.u32 %s118, 4
          %s126 = int_to_ptr.vmem [resolvable:$true] %s125
          %131 = dma.hbm_to_vmem [thread:$0]  %s124, 128, %s126, %s115, 32, 32, 2
        $region20: #{tpu_custom_call.1} parent=15 // pred_fallthru
          _
        // Predicated region
        $region21: #{tpu_custom_call.1} parent=15 // pred_check
          %p132 = pneg %p60
        $region22: #{tpu_custom_call.1} parent=15 // pred_check_branch
          %134 = sbr.rel (%p132) target = $region24
        $region23: #{tpu_custom_call.1} parent=15 // pred_region
          %s135 = smul.u32 4, %s14
          %p136 = scmp.lt.s32.totalorder %s135, 15
          %s137 = scalar_select %p136, %s135, 15
          %s138 = scalar_lea.vmem %s1, %s137
          %s139 = smul.u32 4, %s14
        $region24: #{tpu_custom_call.1} parent=15 // pred_fallthru
          _
      $region16: #{tpu_custom_call.1} parent=5 // pred_fallthru
        _
      %p140 = scmp.le.s32.totalorder 1, %s14
      %p141 = scmp.lt.s32.totalorder %s14, 5
      %p142 = pnand %p140, %p141
      %p143 = pneg %p142
      // Predicated region
      $region25: #{tpu_custom_call.1} parent=5 // pred_check
        _
      $region26: #{tpu_custom_call.1} parent=5 // pred_check_branch
        %145 = sbr.rel (%p142) target = $region28
      $region27: #{tpu_custom_call.1} parent=5 // pred_region
        %s146 = ssub.s32 %s14, 1
        %s147 = sand.u32 %s27, 1
        %s148 = scalar_lea.sflag [#allocation3], %s147
        %s149 = sand.u32 %s27, 1
        %s150 = smul.addr %s149, 8
        %s151 = scalar_lea.vmem [#allocation2], %s150
        // Predicated region
        $region29: #{tpu_custom_call.1} parent=27 // pred_check
          %p152 = pneg %p40
        $region30: #{tpu_custom_call.1} parent=27 // pred_check_branch
          %154 = sbr.rel (%p152) target = $region32
        $region31: #{tpu_custom_call.1} parent=27 // pred_region
          %155 = dma.done %s148, 128
        $region32: #{tpu_custom_call.1} parent=27 // pred_fallthru
          _
        %s156 = sand.u32 %s27, 1
        %s157 = scalar_lea.sflag [#allocation3], %s156
        %s158 = sand.u32 %s27, 1
        %s159 = smul.addr %s158, 8
        %s160 = scalar_lea.vmem [#allocation2], %s159
        %p161 = pneg %p40
        %p162 = pneg %p37
        %s163 = smul.u32 4, %s19
        %p164 = scmp.lt.s32.totalorder %s163, 15
        %s165 = scalar_select %p164, %s163, 15
        %s166 = scalar_lea.vmem %s1, %s165
        %p167 = pneg %p66
        %p168 = pneg %p63
        %p169 = pneg %p92
        %p170 = pneg %p89
        %s171 = sand.u32 %s79, 1
        %s172 = scalar_lea.sflag [#allocation4], %s171
        %s173 = sand.u32 %s79, 1
        %s174 = smul.addr %s173, 8
        %s175 = scalar_lea.vmem [#allocation5], %s174
        %s176 = smul.u32 4, %s19
        %s177 = smul.u32 4, %s19
        %p178 = scmp.lt.s32.totalorder %s177, 15
        %s179 = scalar_select %p178, %s177, 15
        %s180 = scalar_lea.vmem %s1, %s179
        %s181 = smul.u32 4, %s19
        %s182 = smul.u32 4, %s19
        %v183 = vld [vmem:[%s151] sm:$0x3]
        %v184 = vld [vmem:[%s151 + $0x2] sm:$0x3]
        %v185 = vld [vmem:[%s151 + $0x4] sm:$0x3]
        %v186 = vld [vmem:[%s151 + $0x6] sm:$0x3]
        %v187 = vld [vmem:[%s180] sm:$0x1]
        %v188 = vld [vmem:[%s180 + $0x1] sm:$0x1]
        %v189 = vld [vmem:[%s180 + $0x2] sm:$0x1]
        %v190 = vld [vmem:[%s180 + $0x3] sm:$0x1]
        %v195 = vlaneseq
        %v196 = vshrl.u32 %v195, 7
        %v197 = vsub.s32 0, %v196
        %v198 = vrot.slane %v187, %v197
        %v199 = vlaneseq
        %v200 = vshrl.u32 %v199, 7
        %v201 = vsub.s32 0, %v200
        %v202 = vrot.slane %v188, %v201
        %v203 = vlaneseq
        %v204 = vshrl.u32 %v203, 7
        %v205 = vsub.s32 0, %v204
        %v206 = vrot.slane %v189, %v205
        %v207 = vlaneseq
        %v208 = vshrl.u32 %v207, 7
        %v209 = vsub.s32 0, %v208
        %v210 = vrot.slane %v190, %v209
        %v215 = vadd.f32 %v183, %v198
        %v216 = vadd.f32 %v184, %v202
        %v217 = vadd.f32 %v185, %v206
        %v218 = vadd.f32 %v186, %v210
        %vm219 = vcmask 254976
        %220 = vst.msk [vmem:[%s175] sm:$0x3] %vm219, %v215
        %221 = vst.msk [vmem:[%s175 + $0x2] sm:$0x3] %vm219, %v216
        %222 = vst.msk [vmem:[%s175 + $0x4] sm:$0x3] %vm219, %v217
        %223 = vst.msk [vmem:[%s175 + $0x6] sm:$0x3] %vm219, %v218
        %s224 = sand.u32 %s79, 1
        %s225 = scalar_lea.sflag [#allocation4], %s224
        %s226 = sand.u32 %s79, 1
        %s227 = smul.addr %s226, 8
        %s228 = scalar_lea.vmem [#allocation5], %s227
        // Predicated region
        $region33: #{tpu_custom_call.1} parent=27 // pred_check
          %p229 = pneg %p89
        $region34: #{tpu_custom_call.1} parent=27 // pred_check_branch
          %231 = sbr.rel (%p229) target = $region36
        $region35: #{tpu_custom_call.1} parent=27 // pred_region
          %s232 = smul.u32 4, %s19
          %s234 = ssub.s32 128, 128
          %235 = vsyncadd %s225, %s234
          %s236 = smul.addr %s232, 32
          %s237 = scalar_lea.hbm %s2, %s236
          %s238 = sshll.u32 %s228, 4
          %s239 = int_to_ptr.vmem [resolvable:$true] %s238
          %244 = dma.vmem_to_hbm [thread:$0]  %s239, 128, %s237, %s225, 32, 32, 2
        $region36: #{tpu_custom_call.1} parent=27 // pred_fallthru
          _
      $region28: #{tpu_custom_call.1} parent=5 // pred_fallthru
        _
      %p245 = scmp.le.s32.totalorder 2, %s14
      // Predicated region
      $region37: #{tpu_custom_call.1} parent=5 // pred_check
        %p246 = pneg %p245
      $region38: #{tpu_custom_call.1} parent=5 // pred_check_branch
        %248 = sbr.rel (%p246) target = $region40
      $region39: #{tpu_custom_call.1} parent=5 // pred_region
        %s249 = ssub.s32 %s14, 2
        // Predicated region
        $region41: #{tpu_custom_call.1} parent=39 // pred_check
          %p250 = pneg %p95
        $region42: #{tpu_custom_call.1} parent=39 // pred_check_branch
          %252 = sbr.rel (%p250) target = $region44
        $region43: #{tpu_custom_call.1} parent=39 // pred_region
          %s253 = sand.u32 %s80, 1
          %s254 = scalar_lea.sflag [#allocation4], %s253
          %s255 = sand.u32 %s80, 1
          %s256 = smul.addr %s255, 8
          %s257 = scalar_lea.vmem [#allocation5], %s256
          %258 = dma.done %s254, 128
        $region44: #{tpu_custom_call.1} parent=39 // pred_fallthru
          _
      $region40: #{tpu_custom_call.1} parent=5 // pred_fallthru
        _
    $region6: #{tpu_custom_call.1} parent=1 // loop_footer
      %s18 = sadd.s32 1, %s14
    $region7: #{tpu_custom_call.1} parent=1 // loop_footer_branch
      %13 = sbr.rel target = $region3
    $region8: #{tpu_custom_call.1} parent=1 // loop_exit
      _
    %259 = vsyncpa [#allocation3], 1
    %s260 = scalar_lea.sflag [#allocation3], 1
    %261 = vsyncpa %s260, 1
    %262 = vsyncpa [#allocation4], 1
    %s263 = scalar_lea.sflag [#allocation4], 1
    %264 = vsyncpa %s263, 1

</llo_original>
